<compile_context>
chip_gen: v5e
topology: v5e:2x2
jax: 0.10.0
libtpu: 0.0.40
codegen_flags: <defaults>
</compile_context>

<pallas_src>
import functools

import jax
import jax.numpy as jnp
import numpy as np
from jax.experimental import pallas as pl
from jax.experimental.pallas import tpu as pltpu


def _attention_dec_kernel(x_ref, tar_ref, wq_ref, wv_ref, wk_ref, wout_ref, bout_ref,
                          o_ref, *, heads):
    x = x_ref[...]          # (n_q, dim)  bf16
    tar = tar_ref[...]      # (n_k, dim)  bf16
    n_q, dim = x.shape
    n_k = tar.shape[0]

    # Head-batched view of the activations (head axis is a leading/major dim; no lane
    # slicing anywhere in this kernel).
    xh = jnp.broadcast_to(x[None], (heads, n_q, dim))
    th = jnp.broadcast_to(tar[None], (heads, n_k, dim))

    # Projections for all heads in one batched MXU matmul each (bf16 in, f32 acc).
    # The attention scale is already folded into wq in the wrapper.
    q = jnp.einsum('hnd,hdc->hnc', xh, wq_ref[...],
                   preferred_element_type=jnp.float32)        # (heads, n_q, head_dim)
    v = jnp.einsum('hnd,hdc->hnc', xh, wv_ref[...],
                   preferred_element_type=jnp.float32)        # (heads, n_q, head_dim)
    k = jnp.einsum('hnd,hdc->hnc', th, wk_ref[...],
                   preferred_element_type=jnp.float32)        # (heads, n_k, head_dim)

    # dots[h, i, j] = <k_hi, q_hj> * scale ; softmax over j (x positions), f32 math.
    dots = jnp.einsum('hkc,hqc->hkq',
                      k.astype(jnp.bfloat16), q.astype(jnp.bfloat16),
                      preferred_element_type=jnp.float32)     # (heads, n_k, n_q) f32
    dots = dots - jnp.max(dots, axis=-1, keepdims=True)
    p = jnp.exp(dots)
    attn = p * pl.reciprocal(jnp.sum(p, axis=-1, keepdims=True), approx=True)

    out_h = jnp.einsum('hkq,hqc->hkc',
                       attn.astype(jnp.bfloat16), v.astype(jnp.bfloat16),
                       preferred_element_type=jnp.float32)    # (heads, n_k, head_dim)

    # Output projection with per-head weight slabs; the 'b h n d -> b n (h d)' concat
    # becomes a sum over the (major) head axis — full-width VPU adds, no relayout.
    o3 = jnp.einsum('hkc,hcd->hkd',
                    out_h.astype(jnp.bfloat16), wout_ref[...],
                    preferred_element_type=jnp.float32)       # (heads, n_k, d_pad)
    o = jnp.sum(o3, axis=0) + bout_ref[...]                   # (n_k, d_pad)
    o_ref[...] = o.astype(o_ref.dtype)
    # TODO(synk): the optional `mask` path (F.pad + masked_fill with -inf) and the
    # optional `self.pos` additive positional term are not implemented (both are None
    # in the default forward path).


def attention_dec(x, tar, w_qv, w_k, w_out, b_out, heads):
    """x: (B, n_q, dim), tar: (B, n_k, dim). Weights already (in, out)."""
    B, n_q, dim = x.shape
    _, n_k, _ = tar.shape
    dim_out = w_out.shape[1]
    assert dim % heads == 0
    head_dim = dim // heads
    scale = dim ** (-0.5)

    # ---- one-time parameter prep (static, outside the kernel) -------------------
    # chunk(2) of the qv weight -> w_q / w_v; fold the attention scale into w_q; split
    # every projection weight per head so the kernel never slices the lane dimension.
    w_q = w_qv[:, :dim] * scale
    w_v = w_qv[:, dim:]

    def split_heads_in(w):                      # (dim, dim) -> (heads, dim, head_dim)
        return jnp.transpose(w.reshape(dim, heads, head_dim), (1, 0, 2))

    wq_h = split_heads_in(w_q).astype(jnp.bfloat16)
    wv_h = split_heads_in(w_v).astype(jnp.bfloat16)
    wk_h = split_heads_in(w_k).astype(jnp.bfloat16)

    # Output projection: per-head slabs, zero-padded to a lane-dense (multiple-of-128)
    # output width; padding is sliced off after the call.
    d_pad = -(-dim_out // 128) * 128
    wout_h = w_out.reshape(heads, head_dim, dim_out)
    wout_h = jnp.pad(wout_h, ((0, 0), (0, 0), (0, d_pad - dim_out))).astype(jnp.bfloat16)
    bout_p = jnp.pad(b_out, (0, d_pad - dim_out)).astype(jnp.float32).reshape(1, d_pad)

    xb = x.astype(jnp.bfloat16)
    tb = tar.astype(jnp.bfloat16)

    kernel = functools.partial(_attention_dec_kernel, heads=heads)

    # TODO(synk): for production shapes (large n_k / dim) add sequence tiling over n_k
    # (online softmax) plus an explicit vmem_limit_bytes / single-buffered weight specs
    # so the working set fits v7x's 64 MiB VMEM; unnecessary at these sizes.
    out_p = pl.pallas_call(
        kernel,
        out_shape=jax.ShapeDtypeStruct((B, n_k, d_pad), x.dtype),
        grid=(B,),
        in_specs=[
            pl.BlockSpec((None, n_q, dim), lambda b: (b, 0, 0)),
            pl.BlockSpec((None, n_k, dim), lambda b: (b, 0, 0)),
            pl.BlockSpec((heads, dim, head_dim), lambda b: (0, 0, 0)),
            pl.BlockSpec((heads, dim, head_dim), lambda b: (0, 0, 0)),
            pl.BlockSpec((heads, dim, head_dim), lambda b: (0, 0, 0)),
            pl.BlockSpec((heads, head_dim, d_pad), lambda b: (0, 0, 0)),
            pl.BlockSpec((1, d_pad), lambda b: (0, 0)),
        ],
        out_specs=pl.BlockSpec((None, n_k, d_pad), lambda b: (b, 0, 0)),
        compiler_params=pltpu.CompilerParams(dimension_semantics=("parallel",)),
    )(xb, tb, wq_h, wv_h, wk_h, wout_h, bout_p)

    return out_p[..., :dim_out]


def attention_dec_ref(x, tar, w_qv, w_k, w_out, b_out, heads):
    """Pure-JAX f32 reference mirroring the PyTorch forward."""
    B, n_q, dim = x.shape
    _, n_k, _ = tar.shape
    d = dim // heads
    scale = dim ** (-0.5)

    qv = x @ w_qv
    q, v = qv[..., :dim], qv[..., dim:]
    k = tar @ w_k

    def split_heads(t):
        b, n, _ = t.shape
        return t.reshape(b, n, heads, d).transpose(0, 2, 1, 3)   # b n (h d) -> b h n d

    qh, vh, kh = split_heads(q), split_heads(v), split_heads(k)
    dots = jnp.einsum('bhid,bhjd->bhij', kh, qh) * scale
    attn = jax.nn.softmax(dots, axis=-1)
    out = jnp.einsum('bhij,bhjd->bhid', attn, vh)
    out = out.transpose(0, 2, 1, 3).reshape(B, n_k, dim)         # b h n d -> b n (h d)
    return out @ w_out + b_out


if __name__ == "__main__":
    B, N_Q, N_K = 2, 8, 16
    DIM, HEADS = 32, 4        # head_dim = 8

    key = jax.random.PRNGKey(0)
    kx, kt, k1, k2, k3, k4 = jax.random.split(key, 6)

    x = jax.random.normal(kx, (B, N_Q, DIM), dtype=jnp.float32)
    tar = jax.random.normal(kt, (B, N_K, DIM), dtype=jnp.float32)

    # Deterministic parameter init (shapes from __init__, stored as (in, out)).
    w_qv = jax.random.normal(k1, (DIM, 2 * DIM), dtype=jnp.float32) * (DIM ** -0.5)
    w_k = jax.random.normal(k2, (DIM, DIM), dtype=jnp.float32) * (DIM ** -0.5)
    w_out = jax.random.normal(k3, (DIM, DIM), dtype=jnp.float32) * (DIM ** -0.5)
    b_out = jax.random.normal(k4, (DIM,), dtype=jnp.float32) * 0.01

    out = attention_dec(x, tar, w_qv, w_k, w_out, b_out, HEADS)
    out = jax.block_until_ready(out)

    ref = attention_dec_ref(x, tar, w_qv, w_k, w_out, b_out, HEADS)
    # bf16 MXU operands (f32 accumulation) -> loosened tolerance vs. the f32 reference.
    np.testing.assert_allclose(np.asarray(out), np.asarray(ref), rtol=2e-2, atol=2e-2)

    print("KERNEL_OK")
</pallas_src>

<mosaic_0001>
module attributes {stable_mosaic.version = 11 : i64} {
  func.func @_attention_dec_kernel(%arg0: i32, %arg1: memref<1x8x32xbf16, #tpu.memory_space<vmem>>, %arg2: memref<1x16x32xbf16, #tpu.memory_space<vmem>>, %arg3: memref<4x32x8xbf16, #tpu.memory_space<vmem>>, %arg4: memref<4x32x8xbf16, #tpu.memory_space<vmem>>, %arg5: memref<4x32x8xbf16, #tpu.memory_space<vmem>>, %arg6: memref<4x8x128xbf16, #tpu.memory_space<vmem>>, %arg7: memref<1x128xf32, #tpu.memory_space<vmem>>, %arg8: memref<1x16x128xf32, #tpu.memory_space<vmem>>) attributes {dimension_semantics = [#tpu.dimension_semantics<parallel>], iteration_bounds = array<i64: 2>, scalar_prefetch = 0 : i64, scratch_operands = 0 : i64, tpu.core_type = #tpu.core_type<tc>, window_params = [{transform_indices = @transform_0, window_bounds = array<i64: 1, 8, 32>}, {transform_indices = @transform_1, window_bounds = array<i64: 1, 16, 32>}, {pipeline_mode = #tpu.pipeline_mode<synchronous>, transform_indices = @transform_2, window_bounds = array<i64: 4, 32, 8>}, {pipeline_mode = #tpu.pipeline_mode<synchronous>, transform_indices = @transform_3, window_bounds = array<i64: 4, 32, 8>}, {pipeline_mode = #tpu.pipeline_mode<synchronous>, transform_indices = @transform_4, window_bounds = array<i64: 4, 32, 8>}, {pipeline_mode = #tpu.pipeline_mode<synchronous>, transform_indices = @transform_5, window_bounds = array<i64: 4, 8, 128>}, {pipeline_mode = #tpu.pipeline_mode<synchronous>, transform_indices = @transform_6, window_bounds = array<i64: 1, 128>}, {transform_indices = @transform_7, window_bounds = array<i64: 1, 16, 128>}]} {
    %c0 = arith.constant 0 : index
    %c0_0 = arith.constant 0 : index
    %c0_1 = arith.constant 0 : index
    %0 = vector.load %arg1[%c0, %c0_0, %c0_1] : memref<1x8x32xbf16, #tpu.memory_space<vmem>>, vector<1x8x32xbf16>
    %1 = vector.shape_cast %0 : vector<1x8x32xbf16> to vector<8x32xbf16>
    %c0_2 = arith.constant 0 : index
    %c0_3 = arith.constant 0 : index
    %c0_4 = arith.constant 0 : index
    %2 = vector.load %arg2[%c0_2, %c0_3, %c0_4] : memref<1x16x32xbf16, #tpu.memory_space<vmem>>, vector<1x16x32xbf16>
    %3 = vector.shape_cast %2 : vector<1x16x32xbf16> to vector<16x32xbf16>
    %4 = vector.shape_cast %1 : vector<8x32xbf16> to vector<1x8x32xbf16>
    %5 = vector.shape_cast %4 : vector<1x8x32xbf16> to vector<1x8x32xbf16>
    %6 = vector.broadcast %5 : vector<1x8x32xbf16> to vector<4x8x32xbf16>
    %7 = vector.shape_cast %3 : vector<16x32xbf16> to vector<1x16x32xbf16>
    %8 = vector.shape_cast %7 : vector<1x16x32xbf16> to vector<1x16x32xbf16>
    %9 = vector.broadcast %8 : vector<1x16x32xbf16> to vector<4x16x32xbf16>
    %c0_5 = arith.constant 0 : index
    %c0_6 = arith.constant 0 : index
    %c0_7 = arith.constant 0 : index
    %10 = vector.load %arg3[%c0_5, %c0_6, %c0_7] : memref<4x32x8xbf16, #tpu.memory_space<vmem>>, vector<4x32x8xbf16>
    "tpu.trace_start"() <{level = 10 : i32, message = "hnd,hdc->hnc"}> : () -> ()
    %cst = arith.constant dense<0.000000e+00> : vector<4x8x8xf32>
    %11 = tpu.matmul %6, %10, %cst {dimension_numbers = #tpu.dot_dimension_numbers<[2], [1], [1], [2], [0, 0, 0, 1, 1, 2], [0], [0]>} : vector<4x8x32xbf16>, vector<4x32x8xbf16>, vector<4x8x8xf32> -> vector<4x8x8xf32>
    "tpu.trace_stop"() : () -> ()
    %c0_8 = arith.constant 0 : index
    %c0_9 = arith.constant 0 : index
    %c0_10 = arith.constant 0 : index
    %12 = vector.load %arg4[%c0_8, %c0_9, %c0_10] : memref<4x32x8xbf16, #tpu.memory_space<vmem>>, vector<4x32x8xbf16>
    "tpu.trace_start"() <{level = 10 : i32, message = "hnd,hdc->hnc"}> : () -> ()
    %cst_11 = arith.constant dense<0.000000e+00> : vector<4x8x8xf32>
    %13 = tpu.matmul %6, %12, %cst_11 {dimension_numbers = #tpu.dot_dimension_numbers<[2], [1], [1], [2], [0, 0, 0, 1, 1, 2], [0], [0]>} : vector<4x8x32xbf16>, vector<4x32x8xbf16>, vector<4x8x8xf32> -> vector<4x8x8xf32>
    "tpu.trace_stop"() : () -> ()
    %c0_12 = arith.constant 0 : index
    %c0_13 = arith.constant 0 : index
    %c0_14 = arith.constant 0 : index
    %14 = vector.load %arg5[%c0_12, %c0_13, %c0_14] : memref<4x32x8xbf16, #tpu.memory_space<vmem>>, vector<4x32x8xbf16>
    "tpu.trace_start"() <{level = 10 : i32, message = "hnd,hdc->hnc"}> : () -> ()
    %cst_15 = arith.constant dense<0.000000e+00> : vector<4x16x8xf32>
    %15 = tpu.matmul %9, %14, %cst_15 {dimension_numbers = #tpu.dot_dimension_numbers<[2], [1], [1], [2], [0, 0, 0, 1, 1, 2], [0], [0]>} : vector<4x16x32xbf16>, vector<4x32x8xbf16>, vector<4x16x8xf32> -> vector<4x16x8xf32>
    "tpu.trace_stop"() : () -> ()
    %16 = arith.truncf %15 : vector<4x16x8xf32> to vector<4x16x8xbf16>
    %17 = arith.truncf %11 : vector<4x8x8xf32> to vector<4x8x8xbf16>
    "tpu.trace_start"() <{level = 10 : i32, message = "hkc,hqc->hkq"}> : () -> ()
    %cst_16 = arith.constant dense<0.000000e+00> : vector<4x16x8xf32>
    %18 = tpu.matmul %16, %17, %cst_16 {dimension_numbers = #tpu.dot_dimension_numbers<[2], [2], [1], [1], [0, 0, 0, 1, 1, 1], [0], [0]>} : vector<4x16x8xbf16>, vector<4x8x8xbf16>, vector<4x16x8xf32> -> vector<4x16x8xf32>
    "tpu.trace_stop"() : () -> ()
    %cst_17 = arith.constant dense<0xFF800000> : vector<4x16xf32>
    %19 = vector.multi_reduction <maximumf>, %18, %cst_17 [2] : vector<4x16x8xf32> to vector<4x16xf32>
    %20 = vector.shape_cast %19 : vector<4x16xf32> to vector<4x16x1xf32>
    %21 = vector.broadcast %20 : vector<4x16x1xf32> to vector<4x16x8xf32>
    %22 = arith.subf %18, %21 : vector<4x16x8xf32>
    %23 = math.exp %22 : vector<4x16x8xf32>
    %cst_18 = arith.constant dense<0.000000e+00> : vector<4x16xf32>
    %24 = vector.multi_reduction <add>, %23, %cst_18 [2] : vector<4x16x8xf32> to vector<4x16xf32>
    %25 = vector.shape_cast %24 : vector<4x16xf32> to vector<4x16x1xf32>
    %26 = tpu.reciprocal %25 {approx = true} : vector<4x16x1xf32> -> vector<4x16x1xf32>
    %27 = vector.broadcast %26 : vector<4x16x1xf32> to vector<4x16x8xf32>
    %28 = arith.mulf %23, %27 : vector<4x16x8xf32>
    %29 = arith.truncf %28 : vector<4x16x8xf32> to vector<4x16x8xbf16>
    %30 = arith.truncf %13 : vector<4x8x8xf32> to vector<4x8x8xbf16>
    "tpu.trace_start"() <{level = 10 : i32, message = "hkq,hqc->hkc"}> : () -> ()
    %cst_19 = arith.constant dense<0.000000e+00> : vector<4x16x8xf32>
    %31 = tpu.matmul %29, %30, %cst_19 {dimension_numbers = #tpu.dot_dimension_numbers<[2], [1], [1], [2], [0, 0, 0, 1, 1, 2], [0], [0]>} : vector<4x16x8xbf16>, vector<4x8x8xbf16>, vector<4x16x8xf32> -> vector<4x16x8xf32>
    "tpu.trace_stop"() : () -> ()
    %32 = arith.truncf %31 : vector<4x16x8xf32> to vector<4x16x8xbf16>
    %c0_20 = arith.constant 0 : index
    %c0_21 = arith.constant 0 : index
    %c0_22 = arith.constant 0 : index
    %33 = vector.load %arg6[%c0_20, %c0_21, %c0_22] : memref<4x8x128xbf16, #tpu.memory_space<vmem>>, vector<4x8x128xbf16>
    "tpu.trace_start"() <{level = 10 : i32, message = "hkc,hcd->hkd"}> : () -> ()
    %cst_23 = arith.constant dense<0.000000e+00> : vector<4x16x128xf32>
    %34 = tpu.matmul %32, %33, %cst_23 {dimension_numbers = #tpu.dot_dimension_numbers<[2], [1], [1], [2], [0, 0, 0, 1, 1, 2], [0], [0]>} : vector<4x16x8xbf16>, vector<4x8x128xbf16>, vector<4x16x128xf32> -> vector<4x16x128xf32>
    "tpu.trace_stop"() : () -> ()
    %cst_24 = arith.constant dense<0.000000e+00> : vector<16x128xf32>
    %35 = vector.multi_reduction <add>, %34, %cst_24 [0] : vector<4x16x128xf32> to vector<16x128xf32>
    %c0_25 = arith.constant 0 : index
    %c0_26 = arith.constant 0 : index
    %36 = vector.load %arg7[%c0_25, %c0_26] : memref<1x128xf32, #tpu.memory_space<vmem>>, vector<1x128xf32>
    %37 = vector.broadcast %36 : vector<1x128xf32> to vector<16x128xf32>
    %38 = arith.addf %35, %37 : vector<16x128xf32>
    %c0_27 = arith.constant 0 : index
    %c0_28 = arith.constant 0 : index
    %c0_29 = arith.constant 0 : index
    %39 = vector.load %arg8[%c0_27, %c0_28, %c0_29] : memref<1x16x128xf32, #tpu.memory_space<vmem>>, vector<1x16x128xf32>
    %40 = vector.shape_cast %39 : vector<1x16x128xf32> to vector<16x128xf32>
    %41 = vector.shape_cast %38 : vector<16x128xf32> to vector<1x16x128xf32>
    tpu.vector_store %arg8[%c0_27, %c0_28, %c0_29], %41 {strides = array<i32>} : memref<1x16x128xf32, #tpu.memory_space<vmem>>, vector<1x16x128xf32>,
    return
  }
  func.func @transform_0(%arg0: i32) -> (i32, i32, i32) {
    %c0_i32 = arith.constant 0 : i32
    %c0_i32_0 = arith.constant 0 : i32
    %c0_i32_1 = arith.constant 0 : i32
    return %arg0, %c0_i32, %c0_i32_0 : i32, i32, i32
  }
  func.func @transform_1(%arg0: i32) -> (i32, i32, i32) {
    %c0_i32 = arith.constant 0 : i32
    %c0_i32_0 = arith.constant 0 : i32
    %c0_i32_1 = arith.constant 0 : i32
    return %arg0, %c0_i32, %c0_i32_0 : i32, i32, i32
  }
  func.func @transform_2(%arg0: i32) -> (i32, i32, i32) {
    %c0_i32 = arith.constant 0 : i32
    %c0_i32_0 = arith.constant 0 : i32
    %c0_i32_1 = arith.constant 0 : i32
    %c0_i32_2 = arith.constant 0 : i32
    return %c0_i32, %c0_i32_0, %c0_i32_1 : i32, i32, i32
  }
  func.func @transform_3(%arg0: i32) -> (i32, i32, i32) {
    %c0_i32 = arith.constant 0 : i32
    %c0_i32_0 = arith.constant 0 : i32
    %c0_i32_1 = arith.constant 0 : i32
    %c0_i32_2 = arith.constant 0 : i32
    return %c0_i32, %c0_i32_0, %c0_i32_1 : i32, i32, i32
  }
  func.func @transform_4(%arg0: i32) -> (i32, i32, i32) {
    %c0_i32 = arith.constant 0 : i32
    %c0_i32_0 = arith.constant 0 : i32
    %c0_i32_1 = arith.constant 0 : i32
    %c0_i32_2 = arith.constant 0 : i32
    return %c0_i32, %c0_i32_0, %c0_i32_1 : i32, i32, i32
  }
  func.func @transform_5(%arg0: i32) -> (i32, i32, i32) {
    %c0_i32 = arith.constant 0 : i32
    %c0_i32_0 = arith.constant 0 : i32
    %c0_i32_1 = arith.constant 0 : i32
    %c0_i32_2 = arith.constant 0 : i32
    return %c0_i32, %c0_i32_0, %c0_i32_1 : i32, i32, i32
  }
  func.func @transform_6(%arg0: i32) -> (i32, i32) {
    %c0_i32 = arith.constant 0 : i32
    %c0_i32_0 = arith.constant 0 : i32
    %c0_i32_1 = arith.constant 0 : i32
    return %c0_i32, %c0_i32_0 : i32, i32
  }
  func.func @transform_7(%arg0: i32) -> (i32, i32, i32) {
    %c0_i32 = arith.constant 0 : i32
    %c0_i32_0 = arith.constant 0 : i32
    %c0_i32_1 = arith.constant 0 : i32
    return %arg0, %c0_i32, %c0_i32_0 : i32, i32, i32
  }
}

</mosaic_0001>

<llo_original>
// kernel: tpu_custom_call.1
$region0: #{tpu_custom_call.1}
  #allocation0 [shape = 'u32[]', space=smem, size = 0x4, offset = 0x4, fixed_abs, tag = 'smem constant byte address 0x4 - core index']
  #allocation1 [shape = 'u32[72,128]{1,0:T(1,128)}', space=vmem, size = 0x9000, scoped, tag = 'internal scratch']
  %s0 = inlined_call_operand.vmem [shape: bf16[2,8,32], index: 0, kind: input, shape index: {}]
  %s1 = inlined_call_operand.vmem [shape: bf16[2,16,32], index: 1, kind: input, shape index: {}]
  %s2 = inlined_call_operand.vmem [shape: bf16[4,32,8], index: 2, kind: input, shape index: {}]
  %s3 = inlined_call_operand.vmem [shape: bf16[4,32,8], index: 3, kind: input, shape index: {}]
  %s4 = inlined_call_operand.vmem [shape: bf16[4,32,8], index: 4, kind: input, shape index: {}]
  %s5 = inlined_call_operand.vmem [shape: bf16[4,8,128], index: 5, kind: input, shape index: {}]
  %s6 = inlined_call_operand.vmem [shape: f32[1,128], index: 6, kind: input, shape index: {}]
  %s7 = inlined_call_operand.hbm [shape: f32[2,16,128], index: 7, kind: output, shape index: {}]
  %s8 = sld [smem:[#allocation0]]
  $region61: #{tpu_custom_call.1} parent=0
    _
  %s10 = ssub.s32 1, %s8
  %s11 = scalar_select 0, %s10, %s8
  $region1: #{tpu_custom_call.1} parent=0
    #allocation2 [shape = 'u8[16384]{0}', space=vmem, size = 0x4000, scoped, tag = 'output window, operand 0']
    #allocation3 [shape = 's32[2]{0}', space=sflag, size = 0x8, scoped, tag = 'scoped memory for tpu_custom_call.1']
    %12 = vsyncpa [#allocation3], 0
    %s13 = scalar_lea.sflag [#allocation3], 1
    %14 = vsyncpa %s13, 0
    loop: start=0, step=1, limit=4
    $region2: #{tpu_custom_call.1} parent=1 // loop_pre_header
      _
    $region3: #{tpu_custom_call.1} parent=1 // loop_header
      %s16 = sphi 0, %s20
      %p17 = scmp.ge.s32.totalorder %s16, 4
      %s26 = sphi 0, %s28
      %s29 = sphi 0, %s26
      %s30 = sphi 0, %s29
      %s46 = sphi 0, %s30
      %s52 = sphi 0, %s54
      %s55 = sphi 0, %s52
      %s56 = sphi 0, %s55
      %s72 = sphi 0, %s56
      %s76 = sphi 0, %s76
      %s78 = sphi 0, %s76
      %s79 = sphi 0, %s78
      %s93 = sphi 0, %s79
      %s97 = sphi 0, %s97
      %s99 = sphi 0, %s97
      %s100 = sphi 0, %s99
      %s114 = sphi 0, %s100
      %s118 = sphi 0, %s118
      %s120 = sphi 0, %s118
      %s121 = sphi 0, %s120
      %s135 = sphi 0, %s121
      %s139 = sphi 0, %s139
      %s141 = sphi 0, %s139
      %s142 = sphi 0, %s141
      %s156 = sphi 0, %s142
      %s160 = sphi 0, %s160
      %s162 = sphi 0, %s160
      %s163 = sphi 0, %s162
      %s177 = sphi 0, %s163
      %s183 = sphi 0, %s185
      %s186 = sphi 0, %s183
      %s187 = sphi 0, %s186
      %s203 = sphi 0, %s187
    $region4: #{tpu_custom_call.1} parent=1 // loop_header_branch
      %19 = sbr.rel (%p17) target = $region8
    $region5: #{tpu_custom_call.1} parent=1 // loop_body
      %s21 = ssub.s32 %s16, 1
      %s22 = ssub.s32 %s16, 2
      %s23 = sadd.s32 %s16, 1
      %s24 = ssub.s32 %s16, %s23
      %p25 = scmp.eq.s32.totalorder %s24, 0
      %s27 = sadd.s32 %s26, 1
      %s28 = scalar_select %p25, %s26, %s27
      %p31 = pneg %p25
      %p32 = scmp.eq.s32.totalorder %s16, 1
      %p33 = por %p31, %p32
      %p34 = scmp.ne.s32.totalorder %s26, %s29
      %p35 = scmp.eq.s32.totalorder %s16, 0
      %p36 = por %p34, %p35
      %p37 = scmp.ne.s32.totalorder %s26, %s29
      %p38 = scmp.eq.s32.totalorder %s21, 1
      %p39 = por %p37, %p38
      %p40 = scmp.ne.s32.totalorder %s29, %s30
      %p41 = scmp.eq.s32.totalorder %s21, 0
      %p42 = por %p40, %p41
      %p43 = scmp.ne.s32.totalorder %s29, %s30
      %p44 = scmp.eq.s32.totalorder %s22, 1
      %p45 = por %p43, %p44
      %p47 = scmp.ne.s32.totalorder %s30, %s46
      %p48 = scmp.eq.s32.totalorder %s22, 0
      %p49 = por %p47, %p48
      %s50 = ssub.s32 %s16, %s23
      %p51 = scmp.eq.s32.totalorder %s50, 0
      %s53 = sadd.s32 %s52, 1
      %s54 = scalar_select %p51, %s52, %s53
      %p57 = pneg %p51
      %p58 = scmp.eq.s32.totalorder %s16, 1
      %p59 = por %p57, %p58
      %p60 = scmp.ne.s32.totalorder %s52, %s55
      %p61 = scmp.eq.s32.totalorder %s16, 0
      %p62 = por %p60, %p61
      %p63 = scmp.ne.s32.totalorder %s52, %s55
      %p64 = scmp.eq.s32.totalorder %s21, 1
      %p65 = por %p63, %p64
      %p66 = scmp.ne.s32.totalorder %s55, %s56
      %p67 = scmp.eq.s32.totalorder %s21, 0
      %p68 = por %p66, %p67
      %p69 = scmp.ne.s32.totalorder %s55, %s56
      %p70 = scmp.eq.s32.totalorder %s22, 1
      %p71 = por %p69, %p70
      %p73 = scmp.ne.s32.totalorder %s56, %s72
      %p74 = scmp.eq.s32.totalorder %s22, 0
      %p75 = por %p73, %p74
      %s77 = sadd.s32 %s76, 1
      %p80 = scmp.eq.s32.totalorder %s16, 1
      %p81 = scmp.ne.s32.totalorder %s76, %s78
      %p82 = scmp.eq.s32.totalorder %s16, 0
      %p83 = por %p81, %p82
      %p84 = scmp.ne.s32.totalorder %s76, %s78
      %p85 = scmp.eq.s32.totalorder %s21, 1
      %p86 = por %p84, %p85
      %p87 = scmp.ne.s32.totalorder %s78, %s79
      %p88 = scmp.eq.s32.totalorder %s21, 0
      %p89 = por %p87, %p88
      %p90 = scmp.ne.s32.totalorder %s78, %s79
      %p91 = scmp.eq.s32.totalorder %s22, 1
      %p92 = por %p90, %p91
      %p94 = scmp.ne.s32.totalorder %s79, %s93
      %p95 = scmp.eq.s32.totalorder %s22, 0
      %p96 = por %p94, %p95
      %s98 = sadd.s32 %s97, 1
      %p101 = scmp.eq.s32.totalorder %s16, 1
      %p102 = scmp.ne.s32.totalorder %s97, %s99
      %p103 = scmp.eq.s32.totalorder %s16, 0
      %p104 = por %p102, %p103
      %p105 = scmp.ne.s32.totalorder %s97, %s99
      %p106 = scmp.eq.s32.totalorder %s21, 1
      %p107 = por %p105, %p106
      %p108 = scmp.ne.s32.totalorder %s99, %s100
      %p109 = scmp.eq.s32.totalorder %s21, 0
      %p110 = por %p108, %p109
      %p111 = scmp.ne.s32.totalorder %s99, %s100
      %p112 = scmp.eq.s32.totalorder %s22, 1
      %p113 = por %p111, %p112
      %p115 = scmp.ne.s32.totalorder %s100, %s114
      %p116 = scmp.eq.s32.totalorder %s22, 0
      %p117 = por %p115, %p116
      %s119 = sadd.s32 %s118, 1
      %p122 = scmp.eq.s32.totalorder %s16, 1
      %p123 = scmp.ne.s32.totalorder %s118, %s120
      %p124 = scmp.eq.s32.totalorder %s16, 0
      %p125 = por %p123, %p124
      %p126 = scmp.ne.s32.totalorder %s118, %s120
      %p127 = scmp.eq.s32.totalorder %s21, 1
      %p128 = por %p126, %p127
      %p129 = scmp.ne.s32.totalorder %s120, %s121
      %p130 = scmp.eq.s32.totalorder %s21, 0
      %p131 = por %p129, %p130
      %p132 = scmp.ne.s32.totalorder %s120, %s121
      %p133 = scmp.eq.s32.totalorder %s22, 1
      %p134 = por %p132, %p133
      %p136 = scmp.ne.s32.totalorder %s121, %s135
      %p137 = scmp.eq.s32.totalorder %s22, 0
      %p138 = por %p136, %p137
      %s140 = sadd.s32 %s139, 1
      %p143 = scmp.eq.s32.totalorder %s16, 1
      %p144 = scmp.ne.s32.totalorder %s139, %s141
      %p145 = scmp.eq.s32.totalorder %s16, 0
      %p146 = por %p144, %p145
      %p147 = scmp.ne.s32.totalorder %s139, %s141
      %p148 = scmp.eq.s32.totalorder %s21, 1
      %p149 = por %p147, %p148
      %p150 = scmp.ne.s32.totalorder %s141, %s142
      %p151 = scmp.eq.s32.totalorder %s21, 0
      %p152 = por %p150, %p151
      %p153 = scmp.ne.s32.totalorder %s141, %s142
      %p154 = scmp.eq.s32.totalorder %s22, 1
      %p155 = por %p153, %p154
      %p157 = scmp.ne.s32.totalorder %s142, %s156
      %p158 = scmp.eq.s32.totalorder %s22, 0
      %p159 = por %p157, %p158
      %s161 = sadd.s32 %s160, 1
      %p164 = scmp.eq.s32.totalorder %s16, 1
      %p165 = scmp.ne.s32.totalorder %s160, %s162
      %p166 = scmp.eq.s32.totalorder %s16, 0
      %p167 = por %p165, %p166
      %p168 = scmp.ne.s32.totalorder %s160, %s162
      %p169 = scmp.eq.s32.totalorder %s21, 1
      %p170 = por %p168, %p169
      %p171 = scmp.ne.s32.totalorder %s162, %s163
      %p172 = scmp.eq.s32.totalorder %s21, 0
      %p173 = por %p171, %p172
      %p174 = scmp.ne.s32.totalorder %s162, %s163
      %p175 = scmp.eq.s32.totalorder %s22, 1
      %p176 = por %p174, %p175
      %p178 = scmp.ne.s32.totalorder %s163, %s177
      %p179 = scmp.eq.s32.totalorder %s22, 0
      %p180 = por %p178, %p179
      %s181 = ssub.s32 %s16, %s23
      %p182 = scmp.eq.s32.totalorder %s181, 0
      %s184 = sadd.s32 %s183, 1
      %s185 = scalar_select %p182, %s183, %s184
      %p188 = pneg %p182
      %p189 = scmp.eq.s32.totalorder %s16, 1
      %p190 = por %p188, %p189
      %p191 = scmp.ne.s32.totalorder %s183, %s186
      %p192 = scmp.eq.s32.totalorder %s16, 0
      %p193 = por %p191, %p192
      %p194 = scmp.ne.s32.totalorder %s183, %s186
      %p195 = scmp.eq.s32.totalorder %s21, 1
      %p196 = por %p194, %p195
      %p197 = scmp.ne.s32.totalorder %s186, %s187
      %p198 = scmp.eq.s32.totalorder %s21, 0
      %p199 = por %p197, %p198
      %p200 = scmp.ne.s32.totalorder %s186, %s187
      %p201 = scmp.eq.s32.totalorder %s22, 1
      %p202 = por %p200, %p201
      %p204 = scmp.ne.s32.totalorder %s187, %s203
      %p205 = scmp.eq.s32.totalorder %s22, 0
      %p206 = por %p204, %p205
      %p207 = scmp.le.s32.totalorder 1, %s16
      %p208 = scmp.lt.s32.totalorder %s16, 3
      %p209 = pnand %p207, %p208
      %p210 = pneg %p209
      // Predicated region
      $region9: #{tpu_custom_call.1} parent=5 // pred_check
        _
      $region10: #{tpu_custom_call.1} parent=5 // pred_check_branch
        %212 = sbr.rel (%p209) target = $region12
      $region11: #{tpu_custom_call.1} parent=5 // pred_region
        %s213 = ssub.s32 %s16, 1
        // Predicated region
        $region13: #{tpu_custom_call.1} parent=11 // pred_check
          %p214 = pneg %p89
        $region14: #{tpu_custom_call.1} parent=11 // pred_check_branch
          %216 = sbr.rel (%p214) target = $region16
        $region15: #{tpu_custom_call.1} parent=11 // pred_region
          _
        $region16: #{tpu_custom_call.1} parent=11 // pred_fallthru
          _
        // Predicated region
        $region17: #{tpu_custom_call.1} parent=11 // pred_check
          %p217 = pneg %p110
        $region18: #{tpu_custom_call.1} parent=11 // pred_check_branch
          %219 = sbr.rel (%p217) target = $region20
        $region19: #{tpu_custom_call.1} parent=11 // pred_region
          _
        $region20: #{tpu_custom_call.1} parent=11 // pred_fallthru
          _
        // Predicated region
        $region21: #{tpu_custom_call.1} parent=11 // pred_check
          %p220 = pneg %p131
        $region22: #{tpu_custom_call.1} parent=11 // pred_check_branch
          %222 = sbr.rel (%p220) target = $region24
        $region23: #{tpu_custom_call.1} parent=11 // pred_region
          _
        $region24: #{tpu_custom_call.1} parent=11 // pred_fallthru
          _
        // Predicated region
        $region25: #{tpu_custom_call.1} parent=11 // pred_check
          %p223 = pneg %p152
        $region26: #{tpu_custom_call.1} parent=11 // pred_check_branch
          %225 = sbr.rel (%p223) target = $region28
        $region27: #{tpu_custom_call.1} parent=11 // pred_region
          _
        $region28: #{tpu_custom_call.1} parent=11 // pred_fallthru
          _
        // Predicated region
        $region29: #{tpu_custom_call.1} parent=11 // pred_check
          %p226 = pneg %p173
        $region30: #{tpu_custom_call.1} parent=11 // pred_check_branch
          %228 = sbr.rel (%p226) target = $region32
        $region31: #{tpu_custom_call.1} parent=11 // pred_region
          _
        $region32: #{tpu_custom_call.1} parent=11 // pred_fallthru
          _
      $region12: #{tpu_custom_call.1} parent=5 // pred_fallthru
        _
      %p229 = scmp.lt.s32.totalorder %s16, 2
      // Predicated region
      $region33: #{tpu_custom_call.1} parent=5 // pred_check
        %p230 = pneg %p229
      $region34: #{tpu_custom_call.1} parent=5 // pred_check_branch
        %232 = sbr.rel (%p230) target = $region36
      $region35: #{tpu_custom_call.1} parent=5 // pred_region
        // Predicated region
        $region37: #{tpu_custom_call.1} parent=35 // pred_check
          %p233 = pneg %p36
        $region38: #{tpu_custom_call.1} parent=35 // pred_check_branch
          %235 = sbr.rel (%p233) target = $region40
        $region39: #{tpu_custom_call.1} parent=35 // pred_region
          %p236 = scmp.lt.s32.totalorder %s16, 1
          %s237 = scalar_select %p236, %s16, 1
          %s238 = smul.addr %s237, 4
          %s239 = scalar_lea.vmem %s0, %s238
        $region40: #{tpu_custom_call.1} parent=35 // pred_fallthru
          _
        // Predicated region
        $region41: #{tpu_custom_call.1} parent=35 // pred_check
          %p240 = pneg %p62
        $region42: #{tpu_custom_call.1} parent=35 // pred_check_branch
          %242 = sbr.rel (%p240) target = $region44
        $region43: #{tpu_custom_call.1} parent=35 // pred_region
          %p243 = scmp.lt.s32.totalorder %s16, 1
          %s244 = scalar_select %p243, %s16, 1
          %s245 = smul.addr %s244, 2
          %s246 = smul.addr %s245, 4
          %s247 = scalar_lea.vmem %s1, %s246
        $region44: #{tpu_custom_call.1} parent=35 // pred_fallthru
          _
      $region36: #{tpu_custom_call.1} parent=5 // pred_fallthru
        _
      %p248 = scmp.le.s32.totalorder 1, %s16
      %p249 = scmp.lt.s32.totalorder %s16, 3
      %p250 = pnand %p248, %p249
      %p251 = pneg %p250
      // Predicated region
      $region45: #{tpu_custom_call.1} parent=5 // pred_check
        _
      $region46: #{tpu_custom_call.1} parent=5 // pred_check_branch
        %253 = sbr.rel (%p250) target = $region48
      $region47: #{tpu_custom_call.1} parent=5 // pred_region
        %s254 = ssub.s32 %s16, 1
        %p255 = scmp.lt.s32.totalorder %s21, 1
        %s256 = scalar_select %p255, %s21, 1
        %s257 = smul.addr %s256, 4
        %s258 = scalar_lea.vmem %s0, %s257
        %p259 = pneg %p42
        %p260 = pneg %p39
        %p261 = scmp.lt.s32.totalorder %s21, 1
        %s262 = scalar_select %p261, %s21, 1
        %s263 = smul.addr %s262, 2
        %s264 = smul.addr %s263, 4
        %s265 = scalar_lea.vmem %s1, %s264
        %p266 = pneg %p68
        %p267 = pneg %p65
        %p268 = pneg %p89
        %p269 = pneg %p86
        %p270 = pneg %p110
        %p271 = pneg %p107
        %p272 = pneg %p131
        %p273 = pneg %p128
        %p274 = pneg %p152
        %p275 = pneg %p149
        %p276 = pneg %p173
        %p277 = pneg %p170
        %p278 = pneg %p199
        %p279 = pneg %p196
        %s280 = sand.u32 %s186, 1
        %s281 = scalar_lea.sflag [#allocation3], %s280
        %s282 = sand.u32 %s186, 1
        %s283 = smul.addr %s282, 16
        %s284 = scalar_lea.vmem [#allocation2], %s283
        %p285 = scmp.lt.s32.totalorder %s21, 1
        %s286 = scalar_select %p285, %s21, 1
        %s287 = smul.addr %s286, 4
        %s288 = scalar_lea.vmem %s0, %s287
        %p289 = scmp.lt.s32.totalorder %s21, 1
        %s290 = scalar_select %p289, %s21, 1
        %s291 = smul.addr %s290, 2
        %s292 = smul.addr %s291, 4
        %s293 = scalar_lea.vmem %s1, %s292
        %v295 = vld [vmem:[%s288] sm:$0xf]
        %v296 = vld [vmem:[%s293] sm:$0xf]
        %v297 = vld [vmem:[%s293 + $0x4] sm:$0xf]
        %v298 = vld [vmem:[%s2] sm:$0xf]
        %v299 = vld [vmem:[%s2 + $0x4] sm:$0xf]
        %v300 = vld [vmem:[%s2 + $0x8] sm:$0xf]
        %v301 = vld [vmem:[%s2 + $0xc] sm:$0xf]
        %v302 = vld [vmem:[%s2 + $0x10] sm:$0xf]
        %v303 = vld [vmem:[%s2 + $0x14] sm:$0xf]
        %v304 = vld [vmem:[%s2 + $0x18] sm:$0xf]
        %v305 = vld [vmem:[%s2 + $0x1c] sm:$0xf]
        %v306 = vld [vmem:[%s2 + $0x20] sm:$0xf]
        %v307 = vld [vmem:[%s2 + $0x24] sm:$0xf]
        %v308 = vld [vmem:[%s2 + $0x28] sm:$0xf]
        %v309 = vld [vmem:[%s2 + $0x2c] sm:$0xf]
        %v310 = vld [vmem:[%s2 + $0x30] sm:$0xf]
        %v311 = vld [vmem:[%s2 + $0x34] sm:$0xf]
        %v312 = vld [vmem:[%s2 + $0x38] sm:$0xf]
        %v313 = vld [vmem:[%s2 + $0x3c] sm:$0xf]
        %v318 = vunpack.c.l.b16 %v298
        %v319 = vunpack.c.l.b16 %v299
        %v320 = vunpack.c.l.b16 %v300
        %v321 = vunpack.c.l.b16 %v301
        %v322 = vpack.c.b16 %v319, %v318
        %v323 = vpack.c.b16 %v321, %v320
        %vm326 = vcmask 261120
        %v328 = vsel %vm326, %v295, 0
        %330 = vmatpush.bf16.msra.mxu0 0
        %331 = vmatpush.bf16.msra.mxu0 0
        %332 = vmatpush.bf16.msra.mxu0 0
        %333 = vmatpush.bf16.msra.mxu0 0
        %334 = vmatpush.bf16.msra.mxu0 0
        %335 = vmatpush.bf16.msra.mxu0 0
        %336 = vmatpush.bf16.msra.mxu0 %v323
        %337 = vmatpush.bf16.msra.mxu0 %v322
        %338 = vmatmul.bf16.gmra.mxu0 %v328
        %v339 = vpop.f32.mrf.mxu0
        %v340 = vadd.f32 0.0, %v339
        %v341 = vpop.f32.mrf.mxu0
        %342 = vdwg.mxu0
        %v347 = vunpack.c.l.b16 %v302
        %v348 = vunpack.c.l.b16 %v303
        %v349 = vunpack.c.l.b16 %v304
        %v350 = vunpack.c.l.b16 %v305
        %v351 = vpack.c.b16 %v348, %v347
        %v352 = vpack.c.b16 %v350, %v349
        %355 = vmatpush.bf16.msra.mxu0 0
        %356 = vmatpush.bf16.msra.mxu0 0
        %357 = vmatpush.bf16.msra.mxu0 0
        %358 = vmatpush.bf16.msra.mxu0 0
        %359 = vmatpush.bf16.msra.mxu0 0
        %360 = vmatpush.bf16.msra.mxu0 0
        %361 = vmatpush.bf16.msra.mxu0 %v352
        %362 = vmatpush.bf16.msra.mxu0 %v351
        %363 = vmatmul.bf16.gmra.mxu0 %v328
        %v364 = vpop.f32.mrf.mxu0
        %v365 = vadd.f32 0.0, %v364
        %v366 = vpop.f32.mrf.mxu0
        %367 = vdwg.mxu0
        %v372 = vunpack.c.l.b16 %v306
        %v373 = vunpack.c.l.b16 %v307
        %v374 = vunpack.c.l.b16 %v308
        %v375 = vunpack.c.l.b16 %v309
        %v376 = vpack.c.b16 %v373, %v372
        %v377 = vpack.c.b16 %v375, %v374
        %380 = vmatpush.bf16.msra.mxu0 0
        %381 = vmatpush.bf16.msra.mxu0 0
        %382 = vmatpush.bf16.msra.mxu0 0
        %383 = vmatpush.bf16.msra.mxu0 0
        %384 = vmatpush.bf16.msra.mxu0 0
        %385 = vmatpush.bf16.msra.mxu0 0
        %386 = vmatpush.bf16.msra.mxu0 %v377
        %387 = vmatpush.bf16.msra.mxu0 %v376
        %388 = vmatmul.bf16.gmra.mxu0 %v328
        %v389 = vpop.f32.mrf.mxu0
        %v390 = vadd.f32 0.0, %v389
        %v391 = vpop.f32.mrf.mxu0
        %392 = vdwg.mxu0
        %v397 = vunpack.c.l.b16 %v310
        %v398 = vunpack.c.l.b16 %v311
        %v399 = vunpack.c.l.b16 %v312
        %v400 = vunpack.c.l.b16 %v313
        %v401 = vpack.c.b16 %v398, %v397
        %v402 = vpack.c.b16 %v400, %v399
        %405 = vmatpush.bf16.msra.mxu0 0
        %406 = vmatpush.bf16.msra.mxu0 0
        %407 = vmatpush.bf16.msra.mxu0 0
        %408 = vmatpush.bf16.msra.mxu0 0
        %409 = vmatpush.bf16.msra.mxu0 0
        %410 = vmatpush.bf16.msra.mxu0 0
        %411 = vmatpush.bf16.msra.mxu0 %v402
        %412 = vmatpush.bf16.msra.mxu0 %v401
        %413 = vmatmul.bf16.gmra.mxu0 %v328
        %v414 = vpop.f32.mrf.mxu0
        %v415 = vadd.f32 0.0, %v414
        %v416 = vpop.f32.mrf.mxu0
        %417 = vdwg.mxu0
        %v418 = vld [vmem:[%s3] sm:$0xf]
        %v419 = vld [vmem:[%s3 + $0x4] sm:$0xf]
        %v420 = vld [vmem:[%s3 + $0x8] sm:$0xf]
        %v421 = vld [vmem:[%s3 + $0xc] sm:$0xf]
        %v422 = vld [vmem:[%s3 + $0x10] sm:$0xf]
        %v423 = vld [vmem:[%s3 + $0x14] sm:$0xf]
        %v424 = vld [vmem:[%s3 + $0x18] sm:$0xf]
        %v425 = vld [vmem:[%s3 + $0x1c] sm:$0xf]
        %v426 = vld [vmem:[%s3 + $0x20] sm:$0xf]
        %v427 = vld [vmem:[%s3 + $0x24] sm:$0xf]
        %v428 = vld [vmem:[%s3 + $0x28] sm:$0xf]
        %v429 = vld [vmem:[%s3 + $0x2c] sm:$0xf]
        %v430 = vld [vmem:[%s3 + $0x30] sm:$0xf]
        %v431 = vld [vmem:[%s3 + $0x34] sm:$0xf]
        %v432 = vld [vmem:[%s3 + $0x38] sm:$0xf]
        %v433 = vld [vmem:[%s3 + $0x3c] sm:$0xf]
        %v438 = vunpack.c.l.b16 %v418
        %v439 = vunpack.c.l.b16 %v419
        %v440 = vunpack.c.l.b16 %v420
        %v441 = vunpack.c.l.b16 %v421
        %v442 = vpack.c.b16 %v439, %v438
        %v443 = vpack.c.b16 %v441, %v440
        %446 = vmatpush.bf16.msra.mxu0 0
        %447 = vmatpush.bf16.msra.mxu0 0
        %448 = vmatpush.bf16.msra.mxu0 0
        %449 = vmatpush.bf16.msra.mxu0 0
        %450 = vmatpush.bf16.msra.mxu0 0
        %451 = vmatpush.bf16.msra.mxu0 0
        %452 = vmatpush.bf16.msra.mxu0 %v443
        %453 = vmatpush.bf16.msra.mxu0 %v442
        %454 = vmatmul.bf16.gmra.mxu0 %v328
        %v455 = vpop.f32.mrf.mxu0
        %v456 = vadd.f32 0.0, %v455
        %v457 = vpop.f32.mrf.mxu0
        %458 = vdwg.mxu0
        %v463 = vunpack.c.l.b16 %v422
        %v464 = vunpack.c.l.b16 %v423
        %v465 = vunpack.c.l.b16 %v424
        %v466 = vunpack.c.l.b16 %v425
        %v467 = vpack.c.b16 %v464, %v463
        %v468 = vpack.c.b16 %v466, %v465
        %471 = vmatpush.bf16.msra.mxu0 0
        %472 = vmatpush.bf16.msra.mxu0 0
        %473 = vmatpush.bf16.msra.mxu0 0
        %474 = vmatpush.bf16.msra.mxu0 0
        %475 = vmatpush.bf16.msra.mxu0 0
        %476 = vmatpush.bf16.msra.mxu0 0
        %477 = vmatpush.bf16.msra.mxu0 %v468
        %478 = vmatpush.bf16.msra.mxu0 %v467
        %479 = vmatmul.bf16.gmra.mxu0 %v328
        %v480 = vpop.f32.mrf.mxu0
        %v481 = vadd.f32 0.0, %v480
        %v482 = vpop.f32.mrf.mxu0
        %483 = vdwg.mxu0
        %v488 = vunpack.c.l.b16 %v426
        %v489 = vunpack.c.l.b16 %v427
        %v490 = vunpack.c.l.b16 %v428
        %v491 = vunpack.c.l.b16 %v429
        %v492 = vpack.c.b16 %v489, %v488
        %v493 = vpack.c.b16 %v491, %v490
        %496 = vmatpush.bf16.msra.mxu0 0
        %497 = vmatpush.bf16.msra.mxu0 0
        %498 = vmatpush.bf16.msra.mxu0 0
        %499 = vmatpush.bf16.msra.mxu0 0
        %500 = vmatpush.bf16.msra.mxu0 0
        %501 = vmatpush.bf16.msra.mxu0 0
        %502 = vmatpush.bf16.msra.mxu0 %v493
        %503 = vmatpush.bf16.msra.mxu0 %v492
        %504 = vmatmul.bf16.gmra.mxu0 %v328
        %v505 = vpop.f32.mrf.mxu0
        %v506 = vadd.f32 0.0, %v505
        %v507 = vpop.f32.mrf.mxu0
        %508 = vdwg.mxu0
        %v513 = vunpack.c.l.b16 %v430
        %v514 = vunpack.c.l.b16 %v431
        %v515 = vunpack.c.l.b16 %v432
        %v516 = vunpack.c.l.b16 %v433
        %v517 = vpack.c.b16 %v514, %v513
        %v518 = vpack.c.b16 %v516, %v515
        %521 = vmatpush.bf16.msra.mxu0 0
        %522 = vmatpush.bf16.msra.mxu0 0
        %523 = vmatpush.bf16.msra.mxu0 0
        %524 = vmatpush.bf16.msra.mxu0 0
        %525 = vmatpush.bf16.msra.mxu0 0
        %526 = vmatpush.bf16.msra.mxu0 0
        %527 = vmatpush.bf16.msra.mxu0 %v518
        %528 = vmatpush.bf16.msra.mxu0 %v517
        %529 = vmatmul.bf16.gmra.mxu0 %v328
        %v530 = vpop.f32.mrf.mxu0
        %v531 = vadd.f32 0.0, %v530
        %v532 = vpop.f32.mrf.mxu0
        %533 = vdwg.mxu0
        %v534 = vld [vmem:[%s4] sm:$0xf]
        %v535 = vld [vmem:[%s4 + $0x4] sm:$0xf]
        %v536 = vld [vmem:[%s4 + $0x8] sm:$0xf]
        %v537 = vld [vmem:[%s4 + $0xc] sm:$0xf]
        %v538 = vld [vmem:[%s4 + $0x10] sm:$0xf]
        %v539 = vld [vmem:[%s4 + $0x14] sm:$0xf]
        %v540 = vld [vmem:[%s4 + $0x18] sm:$0xf]
        %v541 = vld [vmem:[%s4 + $0x1c] sm:$0xf]
        %v542 = vld [vmem:[%s4 + $0x20] sm:$0xf]
        %v543 = vld [vmem:[%s4 + $0x24] sm:$0xf]
        %v544 = vld [vmem:[%s4 + $0x28] sm:$0xf]
        %v545 = vld [vmem:[%s4 + $0x2c] sm:$0xf]
        %v546 = vld [vmem:[%s4 + $0x30] sm:$0xf]
        %v547 = vld [vmem:[%s4 + $0x34] sm:$0xf]
        %v548 = vld [vmem:[%s4 + $0x38] sm:$0xf]
        %v549 = vld [vmem:[%s4 + $0x3c] sm:$0xf]
        %v552 = vunpack.c.l.b16 %v296
        %v553 = vunpack.c.l.b16 %v297
        %v554 = vpack.c.b16 %v553, %v552
        %v559 = vunpack.c.l.b16 %v534
        %v560 = vunpack.c.l.b16 %v535
        %v561 = vunpack.c.l.b16 %v536
        %v562 = vunpack.c.l.b16 %v537
        %v563 = vpack.c.b16 %v560, %v559
        %v564 = vpack.c.b16 %v562, %v561
        %v568 = vsel %vm326, %v554, 0
        %570 = vmatpush.bf16.msra.mxu0 0
        %571 = vmatpush.bf16.msra.mxu0 0
        %572 = vmatpush.bf16.msra.mxu0 0
        %573 = vmatpush.bf16.msra.mxu0 0
        %574 = vmatpush.bf16.msra.mxu0 0
        %575 = vmatpush.bf16.msra.mxu0 0
        %576 = vmatpush.bf16.msra.mxu0 %v564
        %577 = vmatpush.bf16.msra.mxu0 %v563
        %578 = vmatmul.bf16.gmra.mxu0 %v568
        %v579 = vpop.f32.mrf.mxu0
        %v580 = vadd.f32 0.0, %v579
        %v581 = vpop.f32.mrf.mxu0
        %v582 = vadd.f32 0.0, %v581
        %583 = vdwg.mxu0
        %v588 = vunpack.c.l.b16 %v538
        %v589 = vunpack.c.l.b16 %v539
        %v590 = vunpack.c.l.b16 %v540
        %v591 = vunpack.c.l.b16 %v541
        %v592 = vpack.c.b16 %v589, %v588
        %v593 = vpack.c.b16 %v591, %v590
        %596 = vmatpush.bf16.msra.mxu0 0
        %597 = vmatpush.bf16.msra.mxu0 0
        %598 = vmatpush.bf16.msra.mxu0 0
        %599 = vmatpush.bf16.msra.mxu0 0
        %600 = vmatpush.bf16.msra.mxu0 0
        %601 = vmatpush.bf16.msra.mxu0 0
        %602 = vmatpush.bf16.msra.mxu0 %v593
        %603 = vmatpush.bf16.msra.mxu0 %v592
        %604 = vmatmul.bf16.gmra.mxu0 %v568
        %v605 = vpop.f32.mrf.mxu0
        %v606 = vadd.f32 0.0, %v605
        %v607 = vpop.f32.mrf.mxu0
        %v608 = vadd.f32 0.0, %v607
        %609 = vdwg.mxu0
        %v614 = vunpack.c.l.b16 %v542
        %v615 = vunpack.c.l.b16 %v543
        %v616 = vunpack.c.l.b16 %v544
        %v617 = vunpack.c.l.b16 %v545
        %v618 = vpack.c.b16 %v615, %v614
        %v619 = vpack.c.b16 %v617, %v616
        %622 = vmatpush.bf16.msra.mxu0 0
        %623 = vmatpush.bf16.msra.mxu0 0
        %624 = vmatpush.bf16.msra.mxu0 0
        %625 = vmatpush.bf16.msra.mxu0 0
        %626 = vmatpush.bf16.msra.mxu0 0
        %627 = vmatpush.bf16.msra.mxu0 0
        %628 = vmatpush.bf16.msra.mxu0 %v619
        %629 = vmatpush.bf16.msra.mxu0 %v618
        %630 = vmatmul.bf16.gmra.mxu0 %v568
        %v631 = vpop.f32.mrf.mxu0
        %v632 = vadd.f32 0.0, %v631
        %v633 = vpop.f32.mrf.mxu0
        %v634 = vadd.f32 0.0, %v633
        %635 = vdwg.mxu0
        %v640 = vunpack.c.l.b16 %v546
        %v641 = vunpack.c.l.b16 %v547
        %v642 = vunpack.c.l.b16 %v548
        %v643 = vunpack.c.l.b16 %v549
        %v644 = vpack.c.b16 %v641, %v640
        %v645 = vpack.c.b16 %v643, %v642
        %648 = vmatpush.bf16.msra.mxu0 0
        %649 = vmatpush.bf16.msra.mxu0 0
        %650 = vmatpush.bf16.msra.mxu0 0
        %651 = vmatpush.bf16.msra.mxu0 0
        %652 = vmatpush.bf16.msra.mxu0 0
        %653 = vmatpush.bf16.msra.mxu0 0
        %654 = vmatpush.bf16.msra.mxu0 %v645
        %655 = vmatpush.bf16.msra.mxu0 %v644
        %656 = vmatmul.bf16.gmra.mxu0 %v568
        %v657 = vpop.f32.mrf.mxu0
        %v658 = vadd.f32 0.0, %v657
        %v659 = vpop.f32.mrf.mxu0
        %v660 = vadd.f32 0.0, %v659
        %661 = vdwg.mxu0
        %v662 = vpack.c.bf16 %v580, %v580
        %v663 = vpack.c.bf16 %v582, %v582
        %v664 = vpack.c.bf16 %v606, %v606
        %v665 = vpack.c.bf16 %v608, %v608
        %v666 = vpack.c.bf16 %v632, %v632
        %v667 = vpack.c.bf16 %v634, %v634
        %v668 = vpack.c.bf16 %v658, %v658
        %v669 = vpack.c.bf16 %v660, %v660
        %v670 = vpack.c.bf16 %v340, %v340
        %v671 = vpack.c.bf16 %v365, %v365
        %v672 = vpack.c.bf16 %v390, %v390
        %v673 = vpack.c.bf16 %v415, %v415
        %v676 = vunpack.c.l.b16 %v662
        %v677 = vunpack.c.l.b16 %v663
        %v678 = vpack.c.b16 %v677, %v676
        %vm679 = vcmask 64512
        %v681 = vsel %vm679, %v678, 0
        %v684 = vsel %vm679, %v670, 0
        %686 = vmatpush.bf16.xpose.msra.mxu0 0
        %687 = vmatpush.bf16.xpose.msra.mxu0 0
        %688 = vmatpush.bf16.xpose.msra.mxu0 0
        %689 = vmatpush.bf16.xpose.msra.mxu0 0
        %690 = vmatpush.bf16.xpose.msra.mxu0 0
        %691 = vmatpush.bf16.xpose.msra.mxu0 0
        %692 = vmatpush.bf16.xpose.msra.mxu0 0
        %693 = vmatpush.bf16.xpose.msra.mxu0 %v684
        %694 = vmatmul.bf16.gmra.mxu0 %v681
        %v695 = vpop.f32.mrf.mxu0
        %v696 = vadd.f32 0.0, %v695
        %v697 = vpop.f32.mrf.mxu0
        %v698 = vadd.f32 0.0, %v697
        %699 = vdwg.mxu0
        %v702 = vunpack.c.l.b16 %v664
        %v703 = vunpack.c.l.b16 %v665
        %v704 = vpack.c.b16 %v703, %v702
        %v706 = vsel %vm679, %v704, 0
        %v709 = vsel %vm679, %v671, 0
        %711 = vmatpush.bf16.xpose.msra.mxu0 0
        %712 = vmatpush.bf16.xpose.msra.mxu0 0
        %713 = vmatpush.bf16.xpose.msra.mxu0 0
        %714 = vmatpush.bf16.xpose.msra.mxu0 0
        %715 = vmatpush.bf16.xpose.msra.mxu0 0
        %716 = vmatpush.bf16.xpose.msra.mxu0 0
        %717 = vmatpush.bf16.xpose.msra.mxu0 0
        %718 = vmatpush.bf16.xpose.msra.mxu0 %v709
        %719 = vmatmul.bf16.gmra.mxu0 %v706
        %v720 = vpop.f32.mrf.mxu0
        %v721 = vadd.f32 0.0, %v720
        %v722 = vpop.f32.mrf.mxu0
        %v723 = vadd.f32 0.0, %v722
        %724 = vdwg.mxu0
        %v727 = vunpack.c.l.b16 %v666
        %v728 = vunpack.c.l.b16 %v667
        %v729 = vpack.c.b16 %v728, %v727
        %v731 = vsel %vm679, %v729, 0
        %v734 = vsel %vm679, %v672, 0
        %736 = vmatpush.bf16.xpose.msra.mxu0 0
        %737 = vmatpush.bf16.xpose.msra.mxu0 0
        %738 = vmatpush.bf16.xpose.msra.mxu0 0
        %739 = vmatpush.bf16.xpose.msra.mxu0 0
        %740 = vmatpush.bf16.xpose.msra.mxu0 0
        %741 = vmatpush.bf16.xpose.msra.mxu0 0
        %742 = vmatpush.bf16.xpose.msra.mxu0 0
        %743 = vmatpush.bf16.xpose.msra.mxu0 %v734
        %744 = vmatmul.bf16.gmra.mxu0 %v731
        %v745 = vpop.f32.mrf.mxu0
        %v746 = vadd.f32 0.0, %v745
        %v747 = vpop.f32.mrf.mxu0
        %v748 = vadd.f32 0.0, %v747
        %749 = vdwg.mxu0
        %v752 = vunpack.c.l.b16 %v668
        %v753 = vunpack.c.l.b16 %v669
        %v754 = vpack.c.b16 %v753, %v752
        %v756 = vsel %vm679, %v754, 0
        %v759 = vsel %vm679, %v673, 0
        %761 = vmatpush.bf16.xpose.msra.mxu0 0
        %762 = vmatpush.bf16.xpose.msra.mxu0 0
        %763 = vmatpush.bf16.xpose.msra.mxu0 0
        %764 = vmatpush.bf16.xpose.msra.mxu0 0
        %765 = vmatpush.bf16.xpose.msra.mxu0 0
        %766 = vmatpush.bf16.xpose.msra.mxu0 0
        %767 = vmatpush.bf16.xpose.msra.mxu0 0
        %768 = vmatpush.bf16.xpose.msra.mxu0 %v759
        %769 = vmatmul.bf16.gmra.mxu0 %v756
        %v770 = vpop.f32.mrf.mxu0
        %v771 = vadd.f32 0.0, %v770
        %v772 = vpop.f32.mrf.mxu0
        %v773 = vadd.f32 0.0, %v772
        %774 = vdwg.mxu0
        %v775 = vsel %vm679, %v696, -inf
        %776 = vmax.xlane.f32.xlu0 %v775
        %v777 = vpop.xlane.xlu0 %776
        %v778 = vsel %vm679, %v698, -inf
        %779 = vmax.xlane.f32.xlu0 %v778
        %v780 = vpop.xlane.xlu0 %779
        %v781 = vsel %vm679, %v721, -inf
        %782 = vmax.xlane.f32.xlu0 %v781
        %v783 = vpop.xlane.xlu0 %782
        %v784 = vsel %vm679, %v723, -inf
        %785 = vmax.xlane.f32.xlu0 %v784
        %v786 = vpop.xlane.xlu0 %785
        %v787 = vsel %vm679, %v746, -inf
        %788 = vmax.xlane.f32.xlu0 %v787
        %v789 = vpop.xlane.xlu0 %788
        %v790 = vsel %vm679, %v748, -inf
        %791 = vmax.xlane.f32.xlu0 %v790
        %v792 = vpop.xlane.xlu0 %791
        %v793 = vsel %vm679, %v771, -inf
        %794 = vmax.xlane.f32.xlu0 %v793
        %v795 = vpop.xlane.xlu0 %794
        %v796 = vsel %vm679, %v773, -inf
        %797 = vmax.xlane.f32.xlu0 %v796
        %v798 = vpop.xlane.xlu0 %797
        %v799 = vsub.f32 %v696, %v777
        %v800 = vsub.f32 %v698, %v780
        %v801 = vsub.f32 %v721, %v783
        %v802 = vsub.f32 %v723, %v786
        %v803 = vsub.f32 %v746, %v789
        %v804 = vsub.f32 %v748, %v792
        %v805 = vsub.f32 %v771, %v795
        %v806 = vsub.f32 %v773, %v798
        %v807 = vmul.f32 %v799, 1.442695
        %v808 = vpow.pop %v807
        %v809 = vmul.f32 %v800, 1.442695
        %v810 = vpow.pop %v809
        %v811 = vmul.f32 %v801, 1.442695
        %v812 = vpow.pop %v811
        %v813 = vmul.f32 %v802, 1.442695
        %v814 = vpow.pop %v813
        %v815 = vmul.f32 %v803, 1.442695
        %v816 = vpow.pop %v815
        %v817 = vmul.f32 %v804, 1.442695
        %v818 = vpow.pop %v817
        %v819 = vmul.f32 %v805, 1.442695
        %v820 = vpow.pop %v819
        %v821 = vmul.f32 %v806, 1.442695
        %v822 = vpow.pop %v821
        %v823 = vsel %vm679, %v808, 0.0
        %824 = vadd.xlane.f32.xlu0 %v823
        %v825 = vpop.xlane.xlu0 %824
        %v826 = vsel %vm679, %v810, 0.0
        %827 = vadd.xlane.f32.xlu0 %v826
        %v828 = vpop.xlane.xlu0 %827
        %v829 = vsel %vm679, %v812, 0.0
        %830 = vadd.xlane.f32.xlu0 %v829
        %v831 = vpop.xlane.xlu0 %830
        %v832 = vsel %vm679, %v814, 0.0
        %833 = vadd.xlane.f32.xlu0 %v832
        %v834 = vpop.xlane.xlu0 %833
        %v835 = vsel %vm679, %v816, 0.0
        %836 = vadd.xlane.f32.xlu0 %v835
        %v837 = vpop.xlane.xlu0 %836
        %v838 = vsel %vm679, %v818, 0.0
        %839 = vadd.xlane.f32.xlu0 %v838
        %v840 = vpop.xlane.xlu0 %839
        %v841 = vsel %vm679, %v820, 0.0
        %842 = vadd.xlane.f32.xlu0 %v841
        %v843 = vpop.xlane.xlu0 %842
        %v844 = vsel %vm679, %v822, 0.0
        %845 = vadd.xlane.f32.xlu0 %v844
        %v846 = vpop.xlane.xlu0 %845
        %v847 = vrcp.pop %v825
        %v848 = vrcp.pop %v828
        %v849 = vrcp.pop %v831
        %v850 = vrcp.pop %v834
        %v851 = vrcp.pop %v837
        %v852 = vrcp.pop %v840
        %v853 = vrcp.pop %v843
        %v854 = vrcp.pop %v846
        %v855 = vmul.f32 %v808, %v847
        %v856 = vmul.f32 %v810, %v848
        %v857 = vmul.f32 %v812, %v849
        %v858 = vmul.f32 %v814, %v850
        %v859 = vmul.f32 %v816, %v851
        %v860 = vmul.f32 %v818, %v852
        %v861 = vmul.f32 %v820, %v853
        %v862 = vmul.f32 %v822, %v854
        %v863 = vpack.c.bf16 %v855, %v855
        %v864 = vpack.c.bf16 %v856, %v856
        %v865 = vpack.c.bf16 %v857, %v857
        %v866 = vpack.c.bf16 %v858, %v858
        %v867 = vpack.c.bf16 %v859, %v859
        %v868 = vpack.c.bf16 %v860, %v860
        %v869 = vpack.c.bf16 %v861, %v861
        %v870 = vpack.c.bf16 %v862, %v862
        %v871 = vpack.c.bf16 %v456, %v456
        %v872 = vpack.c.bf16 %v481, %v481
        %v873 = vpack.c.bf16 %v506, %v506
        %v874 = vpack.c.bf16 %v531, %v531
        %v877 = vunpack.c.l.b16 %v863
        %v878 = vunpack.c.l.b16 %v864
        %v879 = vpack.c.b16 %v878, %v877
        %v881 = vsel %vm679, %v879, 0
        %vm883 = vcmask 1043456
        %v885 = vsel %vm883, %v871, 0
        %887 = vmatpush.bf16.msra.mxu0 0
        %888 = vmatpush.bf16.msra.mxu0 0
        %889 = vmatpush.bf16.msra.mxu0 0
        %890 = vmatpush.bf16.msra.mxu0 0
        %891 = vmatpush.bf16.msra.mxu0 0
        %892 = vmatpush.bf16.msra.mxu0 0
        %893 = vmatpush.bf16.msra.mxu0 0
        %894 = vmatpush.bf16.msra.mxu0 %v885
        %895 = vmatmul.bf16.gmra.mxu0 %v881
        %v896 = vpop.f32.mrf.mxu0
        %v897 = vadd.f32 0.0, %v896
        %v898 = vpop.f32.mrf.mxu0
        %v899 = vadd.f32 0.0, %v898
        %900 = vdwg.mxu0
        %v903 = vunpack.c.l.b16 %v865
        %v904 = vunpack.c.l.b16 %v866
        %v905 = vpack.c.b16 %v904, %v903
        %v907 = vsel %vm679, %v905, 0
        %v910 = vsel %vm883, %v872, 0
        %912 = vmatpush.bf16.msra.mxu0 0
        %913 = vmatpush.bf16.msra.mxu0 0
        %914 = vmatpush.bf16.msra.mxu0 0
        %915 = vmatpush.bf16.msra.mxu0 0
        %916 = vmatpush.bf16.msra.mxu0 0
        %917 = vmatpush.bf16.msra.mxu0 0
        %918 = vmatpush.bf16.msra.mxu0 0
        %919 = vmatpush.bf16.msra.mxu0 %v910
        %920 = vmatmul.bf16.gmra.mxu0 %v907
        %v921 = vpop.f32.mrf.mxu0
        %v922 = vadd.f32 0.0, %v921
        %v923 = vpop.f32.mrf.mxu0
        %v924 = vadd.f32 0.0, %v923
        %925 = vdwg.mxu0
        %v928 = vunpack.c.l.b16 %v867
        %v929 = vunpack.c.l.b16 %v868
        %v930 = vpack.c.b16 %v929, %v928
        %v932 = vsel %vm679, %v930, 0
        %v935 = vsel %vm883, %v873, 0
        %937 = vmatpush.bf16.msra.mxu0 0
        %938 = vmatpush.bf16.msra.mxu0 0
        %939 = vmatpush.bf16.msra.mxu0 0
        %940 = vmatpush.bf16.msra.mxu0 0
        %941 = vmatpush.bf16.msra.mxu0 0
        %942 = vmatpush.bf16.msra.mxu0 0
        %943 = vmatpush.bf16.msra.mxu0 0
        %944 = vmatpush.bf16.msra.mxu0 %v935
        %945 = vmatmul.bf16.gmra.mxu0 %v932
        %v946 = vpop.f32.mrf.mxu0
        %v947 = vadd.f32 0.0, %v946
        %v948 = vpop.f32.mrf.mxu0
        %v949 = vadd.f32 0.0, %v948
        %950 = vdwg.mxu0
        %v953 = vunpack.c.l.b16 %v869
        %v954 = vunpack.c.l.b16 %v870
        %v955 = vpack.c.b16 %v954, %v953
        %v957 = vsel %vm679, %v955, 0
        %v960 = vsel %vm883, %v874, 0
        %962 = vmatpush.bf16.msra.mxu0 0
        %963 = vmatpush.bf16.msra.mxu0 0
        %964 = vmatpush.bf16.msra.mxu0 0
        %965 = vmatpush.bf16.msra.mxu0 0
        %966 = vmatpush.bf16.msra.mxu0 0
        %967 = vmatpush.bf16.msra.mxu0 0
        %968 = vmatpush.bf16.msra.mxu0 0
        %969 = vmatpush.bf16.msra.mxu0 %v960
        %970 = vmatmul.bf16.gmra.mxu0 %v957
        %v971 = vpop.f32.mrf.mxu0
        %v972 = vadd.f32 0.0, %v971
        %v973 = vpop.f32.mrf.mxu0
        %v974 = vadd.f32 0.0, %v973
        %975 = vdwg.mxu0
        %v976 = vpack.c.bf16 %v897, %v897
        %v977 = vpack.c.bf16 %v899, %v899
        %v978 = vpack.c.bf16 %v922, %v922
        %v979 = vpack.c.bf16 %v924, %v924
        %v980 = vpack.c.bf16 %v947, %v947
        %v981 = vpack.c.bf16 %v949, %v949
        %v982 = vpack.c.bf16 %v972, %v972
        %v983 = vpack.c.bf16 %v974, %v974
        %v984 = vld [vmem:[%s5] sm:$0xf]
        %v985 = vld [vmem:[%s5 + $0x4] sm:$0xf]
        %v986 = vld [vmem:[%s5 + $0x8] sm:$0xf]
        %v987 = vld [vmem:[%s5 + $0xc] sm:$0xf]
        %v990 = vunpack.c.l.b16 %v976
        %v991 = vunpack.c.l.b16 %v977
        %v992 = vpack.c.b16 %v991, %v990
        %v994 = vsel %vm679, %v992, 0
        %v997 = vsel %vm883, %v984, 0
        %999 = vmatpush.bf16.msra.mxu0 0
        %1000 = vmatpush.bf16.msra.mxu0 0
        %1001 = vmatpush.bf16.msra.mxu0 0
        %1002 = vmatpush.bf16.msra.mxu0 0
        %1003 = vmatpush.bf16.msra.mxu0 0
        %1004 = vmatpush.bf16.msra.mxu0 0
        %1005 = vmatpush.bf16.msra.mxu0 0
        %1006 = vmatpush.bf16.msra.mxu0 %v997
        %1007 = vmatmul.bf16.gmra.mxu0 %v994
        %v1008 = vpop.f32.mrf.mxu0
        %v1009 = vadd.f32 0.0, %v1008
        %v1010 = vpop.f32.mrf.mxu0
        %v1011 = vadd.f32 0.0, %v1010
        %1012 = vdwg.mxu0
        %v1015 = vunpack.c.l.b16 %v978
        %v1016 = vunpack.c.l.b16 %v979
        %v1017 = vpack.c.b16 %v1016, %v1015
        %v1019 = vsel %vm679, %v1017, 0
        %v1022 = vsel %vm883, %v985, 0
        %1024 = vmatpush.bf16.msra.mxu0 0
        %1025 = vmatpush.bf16.msra.mxu0 0
        %1026 = vmatpush.bf16.msra.mxu0 0
        %1027 = vmatpush.bf16.msra.mxu0 0
        %1028 = vmatpush.bf16.msra.mxu0 0
        %1029 = vmatpush.bf16.msra.mxu0 0
        %1030 = vmatpush.bf16.msra.mxu0 0
        %1031 = vmatpush.bf16.msra.mxu0 %v1022
        %1032 = vmatmul.bf16.gmra.mxu0 %v1019
        %v1033 = vpop.f32.mrf.mxu0
        %v1034 = vadd.f32 0.0, %v1033
        %v1035 = vpop.f32.mrf.mxu0
        %v1036 = vadd.f32 0.0, %v1035
        %1037 = vdwg.mxu0
        %v1040 = vunpack.c.l.b16 %v980
        %v1041 = vunpack.c.l.b16 %v981
        %v1042 = vpack.c.b16 %v1041, %v1040
        %v1044 = vsel %vm679, %v1042, 0
        %v1047 = vsel %vm883, %v986, 0
        %1049 = vmatpush.bf16.msra.mxu0 0
        %1050 = vmatpush.bf16.msra.mxu0 0
        %1051 = vmatpush.bf16.msra.mxu0 0
        %1052 = vmatpush.bf16.msra.mxu0 0
        %1053 = vmatpush.bf16.msra.mxu0 0
        %1054 = vmatpush.bf16.msra.mxu0 0
        %1055 = vmatpush.bf16.msra.mxu0 0
        %1056 = vmatpush.bf16.msra.mxu0 %v1047
        %1057 = vmatmul.bf16.gmra.mxu0 %v1044
        %v1058 = vpop.f32.mrf.mxu0
        %v1059 = vadd.f32 0.0, %v1058
        %v1060 = vpop.f32.mrf.mxu0
        %v1061 = vadd.f32 0.0, %v1060
        %1062 = vdwg.mxu0
        %v1065 = vunpack.c.l.b16 %v982
        %v1066 = vunpack.c.l.b16 %v983
        %v1067 = vpack.c.b16 %v1066, %v1065
        %v1069 = vsel %vm679, %v1067, 0
        %v1072 = vsel %vm883, %v987, 0
        %1074 = vmatpush.bf16.msra.mxu0 0
        %1075 = vmatpush.bf16.msra.mxu0 0
        %1076 = vmatpush.bf16.msra.mxu0 0
        %1077 = vmatpush.bf16.msra.mxu0 0
        %1078 = vmatpush.bf16.msra.mxu0 0
        %1079 = vmatpush.bf16.msra.mxu0 0
        %1080 = vmatpush.bf16.msra.mxu0 0
        %1081 = vmatpush.bf16.msra.mxu0 %v1072
        %1082 = vmatmul.bf16.gmra.mxu0 %v1069
        %v1083 = vpop.f32.mrf.mxu0
        %v1084 = vadd.f32 0.0, %v1083
        %v1085 = vpop.f32.mrf.mxu0
        %v1086 = vadd.f32 0.0, %v1085
        %1087 = vdwg.mxu0
        %v1088 = vadd.f32 %v1009, %v1034
        %v1089 = vadd.f32 %v1088, %v1059
        %v1090 = vadd.f32 %v1089, %v1084
        %v1091 = vadd.f32 %v1011, %v1036
        %v1092 = vadd.f32 %v1091, %v1061
        %v1093 = vadd.f32 %v1092, %v1086
        %v1094 = vld [vmem:[%s6] sm:$0x1]
        %v1096 = vperm.slane %v1094, 0
        %v1098 = vadd.f32 %v1090, %v1096
        %v1099 = vadd.f32 %v1093, %v1096
        %1100 = vst [vmem:[%s284] sm:$0xff] %v1098
        %1101 = vst [vmem:[%s284 + $0x8] sm:$0xff] %v1099
        %s1102 = sand.u32 %s186, 1
        %s1103 = scalar_lea.sflag [#allocation3], %s1102
        %s1104 = sand.u32 %s186, 1
        %s1105 = smul.addr %s1104, 16
        %s1106 = scalar_lea.vmem [#allocation2], %s1105
        // Predicated region
        $region49: #{tpu_custom_call.1} parent=47 // pred_check
          %p1107 = pneg %p196
        $region50: #{tpu_custom_call.1} parent=47 // pred_check_branch
          %1109 = sbr.rel (%p1107) target = $region52
        $region51: #{tpu_custom_call.1} parent=47 // pred_region
          %1111 = vsyncadd %s1103, 0
          %s1112 = smul.addr %s21, 2
          %s1113 = smul.addr %s1112, 8
          %s1114 = scalar_lea.hbm %s7, %s1113
          %s1115 = sshll.u32 %s1106, 4
          %s1116 = int_to_ptr.vmem [resolvable:$true] %s1115
          %s1117 = sshll.u32 %s1114, 4
          %s1118 = int_to_ptr.hbm [resolvable:$true] %s1117
          %1123 = dma.vmem_to_hbm [thread:$0]  %s1116, 256, %s1118, %s1103, 128, 128, 8
        $region52: #{tpu_custom_call.1} parent=47 // pred_fallthru
          _
      $region48: #{tpu_custom_call.1} parent=5 // pred_fallthru
        _
      %p1124 = scmp.le.s32.totalorder 2, %s16
      // Predicated region
      $region53: #{tpu_custom_call.1} parent=5 // pred_check
        %p1125 = pneg %p1124
      $region54: #{tpu_custom_call.1} parent=5 // pred_check_branch
        %1127 = sbr.rel (%p1125) target = $region56
      $region55: #{tpu_custom_call.1} parent=5 // pred_region
        %s1128 = ssub.s32 %s16, 2
        // Predicated region
        $region57: #{tpu_custom_call.1} parent=55 // pred_check
          %p1129 = pneg %p202
        $region58: #{tpu_custom_call.1} parent=55 // pred_check_branch
          %1131 = sbr.rel (%p1129) target = $region60
        $region59: #{tpu_custom_call.1} parent=55 // pred_region
          %s1132 = sand.u32 %s187, 1
          %s1133 = scalar_lea.sflag [#allocation3], %s1132
          %s1134 = sand.u32 %s187, 1
          %s1135 = smul.addr %s1134, 16
          %s1136 = scalar_lea.vmem [#allocation2], %s1135
          %1138 = dma.done %s1133, 256
        $region60: #{tpu_custom_call.1} parent=55 // pred_fallthru
          _
      $region56: #{tpu_custom_call.1} parent=5 // pred_fallthru
        _
    $region6: #{tpu_custom_call.1} parent=1 // loop_footer
      %s20 = sadd.s32 1, %s16
    $region7: #{tpu_custom_call.1} parent=1 // loop_footer_branch
      %15 = sbr.rel target = $region3
    $region8: #{tpu_custom_call.1} parent=1 // loop_exit
      _
    %1139 = vsyncpa [#allocation3], 1
    %s1140 = scalar_lea.sflag [#allocation3], 1
    %1141 = vsyncpa %s1140, 1

</llo_original>
